<compile_context>
chip_gen: v7x
topology: tpu7x:2x2x1
jax: 0.10.0
libtpu: 0.0.40
codegen_flags: <defaults>
</compile_context>

<pallas_src>
import functools
import math

import jax
import jax.numpy as jnp
from jax.experimental import pallas as pl
from jax.experimental.pallas import tpu as pltpu


# ---------------------------------------------------------------------------
# Helpers
# ---------------------------------------------------------------------------

def _row_tile(m, cap=512):
    """Largest row tile <= cap that divides m and is a multiple of 8,
    else the full extent (so block dims stay legal)."""
    for t in (cap, 256, 128, 64, 32, 16, 8):
        if t <= m and m % t == 0:
            return t
    return m


def _batch_tile(b, cap=8):
    """How many images share one weight fetch inside the fused block kernel."""
    for t in range(min(cap, b), 0, -1):
        if b % t == 0:
            return t
    return 1


def _vmem_limit_bytes():
    """~3/4 of physical VMEM (48 MiB on v7x, 96 MiB on v5e/v6e)."""
    try:
        cap = pltpu.get_tpu_info().vmem_capacity_bytes
    except Exception:
        cap = 64 * 1024 * 1024
    return max(32 * 1024 * 1024, int(cap * 3 // 4))


def _layer_norm(v, gamma, beta, eps=1e-6):
    mu = jnp.mean(v, axis=-1, keepdims=True)
    var = jnp.mean((v - mu) ** 2, axis=-1, keepdims=True)
    return (v - mu) * jax.lax.rsqrt(var + eps) * gamma + beta


def _gelu_exact(v):
    # torch.nn.GELU default: exact erf formulation (kept in f32 for parity;
    # bf16 elementwise would roughly double VPU throughput on v6e/v7x).
    return 0.5 * v * (1.0 + jax.lax.erf(v * (1.0 / math.sqrt(2.0))))


# ---------------------------------------------------------------------------
# Pallas kernels
# ---------------------------------------------------------------------------

def _matmul_bias_kernel(x_ref, w_ref, b_ref, o_ref):
    """o = x @ w + b  (patch-embedding projection), bf16 in / f32 acc out."""
    o_ref[...] = (
        jnp.dot(x_ref[...], w_ref[...], preferred_element_type=jnp.float32)
        + b_ref[...]
    )


def _vit_layers_kernel(
    x_ref,                                    # (Bt, N, D) f32 input tokens
    ln1g_ref, ln1b_ref,
    wqkv_ref, bqkv_ref,                       # (1, D, 3D) bf16 / (1, 1, 3D) f32
    wproj_ref, bproj_ref,                     # (1, D, D) bf16 / (1, 1, D) f32
    ln2g_ref, ln2b_ref,
    w1_ref, b1_ref, w2_ref, b2_ref,           # MLP weights
    fng_ref, fnb_ref,                         # final LayerNorm (1, D)
    o_ref,                                    # (Bt, 1, D) f32 cls embeddings
    acc_ref,                                  # scratch (Bt, N, D) f32, VMEM
    *, num_heads,
):
    """All pre-norm ViT blocks for a block of Bt images.

    grid = (B//Bt, depth).  The activations stay resident in the VMEM scratch
    for the whole layer stack; per-layer weights stream in via the layer
    grid index and are shared by all Bt images in the block.  Only the
    final-normed cls rows are written to HBM (on the last layer).
    """
    bf16 = jnp.bfloat16
    layer = pl.program_id(1)

    @pl.when(layer == 0)
    def _init():
        acc_ref[...] = x_ref[...]

    bt, n_tok, d_model = acc_ref.shape
    hd = d_model // num_heads

    # Hoist per-layer weight loads out of the per-image loop.
    ln1g = ln1g_ref[0]
    ln1b = ln1b_ref[0]
    wqkv = wqkv_ref[0]
    bqkv = bqkv_ref[0]
    wproj = wproj_ref[0]
    bproj = bproj_ref[0]
    ln2g = ln2g_ref[0]
    ln2b = ln2b_ref[0]
    w1 = w1_ref[0]
    b1 = b1_ref[0]
    w2 = w2_ref[0]
    b2 = b2_ref[0]

    for bi in range(bt):
        x = acc_ref[bi]                                      # (N, D) f32

        # ---------------- attention ----------------
        y = _layer_norm(x, ln1g, ln1b)
        # One fused, full-width QKV projection (scale folded into Q offline).
        qkv = jnp.dot(y.astype(bf16), wqkv,
                      preferred_element_type=jnp.float32) + bqkv   # (N, 3D)

        ctx_heads = []
        for h in range(num_heads):
            q_h = qkv[:, h * hd:(h + 1) * hd]
            k_h = qkv[:, d_model + h * hd:d_model + (h + 1) * hd]
            v_h = qkv[:, 2 * d_model + h * hd:2 * d_model + (h + 1) * hd]

            s = jnp.einsum('nd,md->nm', q_h.astype(bf16), k_h.astype(bf16),
                           preferred_element_type=jnp.float32)      # (N, N)
            s = s - jnp.max(s, axis=-1, keepdims=True)
            e = jnp.exp(s)
            p = e / jnp.sum(e, axis=-1, keepdims=True)
            ctx_heads.append(
                jnp.dot(p.astype(bf16), v_h.astype(bf16),
                        preferred_element_type=jnp.float32))        # (N, hd)

        ctx = jnp.concatenate(ctx_heads, axis=-1)                   # (N, D)
        attn = jnp.dot(ctx.astype(bf16), wproj,
                       preferred_element_type=jnp.float32) + bproj
        x = x + attn

        # ---------------- MLP ----------------
        y2 = _layer_norm(x, ln2g, ln2b)
        h1 = jnp.dot(y2.astype(bf16), w1,
                     preferred_element_type=jnp.float32) + b1
        h1 = _gelu_exact(h1)
        h2 = jnp.dot(h1.astype(bf16), w2,
                     preferred_element_type=jnp.float32) + b2

        acc_ref[bi] = x + h2

    # Fused final LayerNorm + cls-token pooling on the last layer only.
    @pl.when(layer == pl.num_programs(1) - 1)
    def _finalize():
        cls = acc_ref[...][:, 0:1, :]                        # (Bt, 1, D)
        o_ref[...] = _layer_norm(cls, fng_ref[...], fnb_ref[...])


# ---------------------------------------------------------------------------
# Wrappers calling pallas_call
# ---------------------------------------------------------------------------

def patch_embed(patches_flat, w, b):
    """(M, C*p*p) bf16 @ (C*p*p, D) bf16 + (1, D) f32, row-tiled."""
    m, kdim = patches_flat.shape
    d = w.shape[1]
    tm = _row_tile(m)
    return pl.pallas_call(
        _matmul_bias_kernel,
        out_shape=jax.ShapeDtypeStruct((m, d), jnp.float32),
        grid=(m // tm,),
        in_specs=[
            pl.BlockSpec((tm, kdim), lambda i: (i, 0)),
            pl.BlockSpec((kdim, d), lambda i: (0, 0)),
            pl.BlockSpec((1, d), lambda i: (0, 0)),
        ],
        out_specs=pl.BlockSpec((tm, d), lambda i: (i, 0)),
        compiler_params=pltpu.CompilerParams(
            dimension_semantics=("parallel",)),
    )(patches_flat, w, b)


_LAYER_PARAM_ORDER = (
    "ln1_g", "ln1_b",
    "wqkv", "bqkv",
    "wproj", "bproj",
    "ln2_g", "ln2_b",
    "w1", "b1", "w2", "b2",
)


def vit_layers(x, params, norm_g, norm_b, num_heads, batch_tile=None):
    """x: (B, N, D) f32.  Runs ALL transformer blocks + final cls-norm in one
    fused pallas_call.  Returns (B, D) final-normed cls embeddings."""
    B, N, D = x.shape
    depth = params["wqkv"].shape[0]
    bt = batch_tile or _batch_tile(B)
    weights = [params[k] for k in _LAYER_PARAM_ORDER]

    def weight_spec(w):
        return pl.BlockSpec((1,) + tuple(w.shape[1:]), lambda b, l: (l, 0, 0))

    kernel = functools.partial(_vit_layers_kernel, num_heads=num_heads)

    out = pl.pallas_call(
        kernel,
        out_shape=jax.ShapeDtypeStruct((B, 1, D), jnp.float32),
        grid=(B // bt, depth),
        in_specs=[pl.BlockSpec((bt, N, D), lambda b, l: (b, 0, 0))]
                 + [weight_spec(w) for w in weights]
                 + [pl.BlockSpec((1, D), lambda b, l: (0, 0)),
                    pl.BlockSpec((1, D), lambda b, l: (0, 0))],
        out_specs=pl.BlockSpec((bt, 1, D), lambda b, l: (b, 0, 0)),
        scratch_shapes=[pltpu.VMEM((bt, N, D), jnp.float32)],
        compiler_params=pltpu.CompilerParams(
            dimension_semantics=("parallel", "arbitrary"),
            vmem_limit_bytes=_vmem_limit_bytes(),
        ),
    )(x, *weights, norm_g, norm_b)
    return out.reshape(B, D)


# ---------------------------------------------------------------------------
# Model: parameter init + forward (num_classes=0 -> features of the cls token)
# ---------------------------------------------------------------------------

class TimmViTEncoderPallas:
    def __init__(self, key, *, img_size=16, patch_size=8, in_chans=3,
                 embed_dim=32, depth=2, num_heads=2, mlp_ratio=4):
        assert img_size % patch_size == 0
        assert embed_dim % num_heads == 0
        self.img_size = img_size
        self.patch_size = patch_size
        self.in_chans = in_chans
        self.embed_dim = embed_dim
        self.depth = depth
        self.num_heads = num_heads
        self.head_dim = embed_dim // num_heads
        self.num_patches = (img_size // patch_size) ** 2
        self.seq_len = self.num_patches + 1          # + class token
        hidden = embed_dim * mlp_ratio
        patch_dim = in_chans * patch_size * patch_size

        keys = iter(jax.random.split(key, 8 + 8 * depth))

        def nrm(shape):
            return 0.02 * jax.random.normal(next(keys), shape, jnp.float32)

        bf16 = jnp.bfloat16
        D, hd = embed_dim, self.head_dim
        scale = hd ** -0.5

        # Patch embedding: conv weight (D, C, p, p) flattened to (C*p*p, D).
        self.w_patch = nrm((patch_dim, D)).astype(bf16)
        self.b_patch = jnp.zeros((1, D), jnp.float32)
        self.cls_token = nrm((1, 1, D))
        self.pos_embed = nrm((1, self.seq_len, D))

        # 1/sqrt(hd) folded into the Q third of the fused QKV weight + bias.
        q_fold = jnp.concatenate(
            [jnp.full((D,), scale, jnp.float32), jnp.ones((2 * D,), jnp.float32)])

        acc = {k: [] for k in _LAYER_PARAM_ORDER}
        for _ in range(depth):
            w_qkv = nrm((D, 3 * D))
            b_qkv = jnp.zeros((3 * D,), jnp.float32)
            w_proj = nrm((D, D))

            acc["ln1_g"].append(jnp.ones((1, D), jnp.float32))
            acc["ln1_b"].append(jnp.zeros((1, D), jnp.float32))
            acc["wqkv"].append((w_qkv * q_fold[None, :]).astype(bf16))
            acc["bqkv"].append((b_qkv * q_fold).reshape(1, 3 * D))
            acc["wproj"].append(w_proj.astype(bf16))
            acc["bproj"].append(jnp.zeros((1, D), jnp.float32))
            acc["ln2_g"].append(jnp.ones((1, D), jnp.float32))
            acc["ln2_b"].append(jnp.zeros((1, D), jnp.float32))
            acc["w1"].append(nrm((D, hidden)).astype(bf16))
            acc["b1"].append(jnp.zeros((1, hidden), jnp.float32))
            acc["w2"].append(nrm((hidden, D)).astype(bf16))
            acc["b2"].append(jnp.zeros((1, D), jnp.float32))

        self.layer_params = {k: jnp.stack(v, axis=0) for k, v in acc.items()}

        self.norm_g = jnp.ones((1, D), jnp.float32)
        self.norm_b = jnp.zeros((1, D), jnp.float32)
        # head: num_classes=0 -> Identity (no params)

    def _extract_patches(self, x):
        """NCHW -> (B*Np, C*p*p), flatten order (C, ph, pw)."""
        B, C, Hh, Ww = x.shape
        p = self.patch_size
        gh, gw = Hh // p, Ww // p
        x = x.reshape(B, C, gh, p, gw, p)
        x = jnp.transpose(x, (0, 2, 4, 1, 3, 5))      # (B, gh, gw, C, p, p)
        return x.reshape(B * gh * gw, C * p * p)

    def forward(self, x):
        B = x.shape[0]
        D = self.embed_dim

        # Patch embedding (Pallas matmul kernel, bf16 operands).
        patches = self._extract_patches(x).astype(jnp.bfloat16)   # (B*Np, Cpp)
        tok = patch_embed(patches, self.w_patch, self.b_patch)    # (B*Np, D)
        tok = tok.reshape(B, self.num_patches, D)

        # cls token + pos embed (glue).
        cls = jnp.broadcast_to(self.cls_token, (B, 1, D))
        tok = jnp.concatenate([cls, tok], axis=1) + self.pos_embed

        # All transformer blocks + final LayerNorm + cls pooling in one fused
        # Pallas kernel (tokens VMEM-resident, only (B, D) written back).
        return vit_layers(tok, self.layer_params, self.norm_g, self.norm_b,
                          self.num_heads)


# ---------------------------------------------------------------------------

if __name__ == "__main__":
    key = jax.random.PRNGKey(0)
    k_param, k_input = jax.random.split(key)

    model = TimmViTEncoderPallas(
        k_param, img_size=16, patch_size=8, in_chans=3,
        embed_dim=32, depth=2, num_heads=2, mlp_ratio=4,
    )

    # NCHW input, like the PyTorch module.
    x = jax.random.normal(k_input, (2, 3, 16, 16), jnp.float32)

    out = model.forward(x)
    out = jax.block_until_ready(out)

    assert out.shape == (2, 32), out.shape
    assert bool(jnp.all(jnp.isfinite(out)))
    print("KERNEL_OK")
</pallas_src>

<mosaic_0001>
module attributes {stable_mosaic.version = 11 : i64} {
  func.func @_matmul_bias_kernel(%arg0: i32, %arg1: memref<8x192xbf16, #tpu.memory_space<vmem>>, %arg2: memref<192x32xbf16, #tpu.memory_space<vmem>>, %arg3: memref<1x32xf32, #tpu.memory_space<vmem>>, %arg4: memref<8x32xf32, #tpu.memory_space<vmem>>) attributes {dimension_semantics = [#tpu.dimension_semantics<parallel>], iteration_bounds = array<i64: 1>, scalar_prefetch = 0 : i64, scratch_operands = 0 : i64, tpu.core_type = #tpu.core_type<tc>, window_params = [{transform_indices = @transform_0, window_bounds = array<i64: 8, 192>}, {pipeline_mode = #tpu.pipeline_mode<synchronous>, transform_indices = @transform_1, window_bounds = array<i64: 192, 32>}, {pipeline_mode = #tpu.pipeline_mode<synchronous>, transform_indices = @transform_2, window_bounds = array<i64: 1, 32>}, {transform_indices = @transform_3, window_bounds = array<i64: 8, 32>}]} {
    %c0 = arith.constant 0 : index
    %c0_0 = arith.constant 0 : index
    %0 = vector.load %arg1[%c0, %c0_0] : memref<8x192xbf16, #tpu.memory_space<vmem>>, vector<8x192xbf16>
    %c0_1 = arith.constant 0 : index
    %c0_2 = arith.constant 0 : index
    %1 = vector.load %arg2[%c0_1, %c0_2] : memref<192x32xbf16, #tpu.memory_space<vmem>>, vector<192x32xbf16>
    %cst = arith.constant dense<0.000000e+00> : vector<8x32xf32>
    %2 = tpu.matmul %0, %1, %cst {dimension_numbers = #tpu.dot_dimension_numbers<[1], [0], [0], [1], [0, 0, 1, 1], [], []>} : vector<8x192xbf16>, vector<192x32xbf16>, vector<8x32xf32> -> vector<8x32xf32>
    %c0_3 = arith.constant 0 : index
    %c0_4 = arith.constant 0 : index
    %3 = vector.load %arg3[%c0_3, %c0_4] : memref<1x32xf32, #tpu.memory_space<vmem>>, vector<1x32xf32>
    %4 = vector.broadcast %3 : vector<1x32xf32> to vector<8x32xf32>
    %5 = arith.addf %2, %4 : vector<8x32xf32>
    %c0_5 = arith.constant 0 : index
    %c0_6 = arith.constant 0 : index
    %6 = vector.load %arg4[%c0_5, %c0_6] : memref<8x32xf32, #tpu.memory_space<vmem>>, vector<8x32xf32>
    tpu.vector_store %arg4[%c0_5, %c0_6], %5 {strides = array<i32>} : memref<8x32xf32, #tpu.memory_space<vmem>>, vector<8x32xf32>,
    return
  }
  func.func @transform_0(%arg0: i32) -> (i32, i32) {
    %c0_i32 = arith.constant 0 : i32
    %c0_i32_0 = arith.constant 0 : i32
    return %arg0, %c0_i32 : i32, i32
  }
  func.func @transform_1(%arg0: i32) -> (i32, i32) {
    %c0_i32 = arith.constant 0 : i32
    %c0_i32_0 = arith.constant 0 : i32
    %c0_i32_1 = arith.constant 0 : i32
    return %c0_i32, %c0_i32_0 : i32, i32
  }
  func.func @transform_2(%arg0: i32) -> (i32, i32) {
    %c0_i32 = arith.constant 0 : i32
    %c0_i32_0 = arith.constant 0 : i32
    %c0_i32_1 = arith.constant 0 : i32
    return %c0_i32, %c0_i32_0 : i32, i32
  }
  func.func @transform_3(%arg0: i32) -> (i32, i32) {
    %c0_i32 = arith.constant 0 : i32
    %c0_i32_0 = arith.constant 0 : i32
    return %arg0, %c0_i32 : i32, i32
  }
}

</mosaic_0001>

<llo_original>
// kernel: tpu_custom_call.1
$region0: #{tpu_custom_call.1}
  #allocation0 [shape = 'u32[]', space=smem, size = 0x4, offset = 0x4, fixed_abs, tag = 'smem constant byte address 0x4 - core index']
  #allocation1 [shape = 'u32[144,128]{1,0:T(1,128)}', space=vmem, size = 0x12000, scoped, tag = 'internal scratch']
  %s0 = inlined_call_operand.vmem [shape: bf16[8,192], index: 0, kind: input, shape index: {}]
  %s1 = inlined_call_operand.vmem [shape: bf16[192,32], index: 1, kind: input, shape index: {}]
  %s2 = inlined_call_operand.vmem [shape: f32[1,32], index: 2, kind: input, shape index: {}]
  %s3 = inlined_call_operand.hbm [shape: f32[8,32], index: 3, kind: output, shape index: {}]
  %s4 = sld [smem:[#allocation0]]
  $region22: #{tpu_custom_call.1} parent=0
    _
  %s6 = ssub.s32 1, %s4
  %s7 = scalar_select 0, %s6, %s4
  $region1: #{tpu_custom_call.1} parent=0
    #allocation2 [shape = 'u8[4096]{0}', space=vmem, size = 0x1000, scoped, tag = 'output window, operand 0, single buffered']
    #allocation3 [shape = 's32[1]{0}', space=sflag, size = 0x4, scoped, tag = 'scoped memory for tpu_custom_call.1']
    %8 = vsyncpa [#allocation3], 0
    // Predicated region
    $region2: #{tpu_custom_call.1} parent=1 // pred_check
      _
    $region3: #{tpu_custom_call.1} parent=1 // pred_check_branch
      %10 = sbr.rel (0) target = $region5
    $region4: #{tpu_custom_call.1} parent=1 // pred_region
      _
    $region5: #{tpu_custom_call.1} parent=1 // pred_fallthru
      _
    // Predicated region
    $region6: #{tpu_custom_call.1} parent=1 // pred_check
      _
    $region7: #{tpu_custom_call.1} parent=1 // pred_check_branch
      %12 = sbr.rel (0) target = $region9
    $region8: #{tpu_custom_call.1} parent=1 // pred_region
      _
    $region9: #{tpu_custom_call.1} parent=1 // pred_fallthru
      _
    // Predicated region
    $region10: #{tpu_custom_call.1} parent=1 // pred_check
      _
    $region11: #{tpu_custom_call.1} parent=1 // pred_check_branch
      %14 = sbr.rel (0) target = $region13
    $region12: #{tpu_custom_call.1} parent=1 // pred_region
      _
    $region13: #{tpu_custom_call.1} parent=1 // pred_fallthru
      _
    %v16 = vld [vmem:[%s0] sm:$0xff]
    %v17 = vld [vmem:[%s1] sm:$0xf]
    %v18 = vld [vmem:[%s1 + $0x4] sm:$0xf]
    %v19 = vld [vmem:[%s1 + $0x8] sm:$0xf]
    %v20 = vld [vmem:[%s1 + $0xc] sm:$0xf]
    %v21 = vld [vmem:[%s1 + $0x10] sm:$0xf]
    %v22 = vld [vmem:[%s1 + $0x14] sm:$0xf]
    %v23 = vld [vmem:[%s1 + $0x18] sm:$0xf]
    %v24 = vld [vmem:[%s1 + $0x1c] sm:$0xf]
    %v25 = vld [vmem:[%s1 + $0x20] sm:$0xf]
    %v26 = vld [vmem:[%s1 + $0x24] sm:$0xf]
    %v27 = vld [vmem:[%s1 + $0x28] sm:$0xf]
    %v28 = vld [vmem:[%s1 + $0x2c] sm:$0xf]
    %v29 = vld [vmem:[%s1 + $0x30] sm:$0xf]
    %v30 = vld [vmem:[%s1 + $0x34] sm:$0xf]
    %v31 = vld [vmem:[%s1 + $0x38] sm:$0xf]
    %v32 = vld [vmem:[%s1 + $0x3c] sm:$0xf]
    %v33 = vld [vmem:[%s1 + $0x40] sm:$0xf]
    %v34 = vld [vmem:[%s1 + $0x44] sm:$0xf]
    %v35 = vld [vmem:[%s1 + $0x48] sm:$0xf]
    %v36 = vld [vmem:[%s1 + $0x4c] sm:$0xf]
    %v37 = vld [vmem:[%s1 + $0x50] sm:$0xf]
    %v38 = vld [vmem:[%s1 + $0x54] sm:$0xf]
    %v39 = vld [vmem:[%s1 + $0x58] sm:$0xf]
    %v40 = vld [vmem:[%s1 + $0x5c] sm:$0xf]
    %v41 = vld [vmem:[%s2] sm:$0x1]
    %v43 = vlaneseq
    %v44 = vshrl.u32 %v43, 7
    %v45 = vsub.s32 0, %v44
    %v46 = vrot.slane %v41, %v45
    %v49 = vunpack.c.l.b16 %v16
    %v50 = vunpack.c.h.b16 %v16
    %v51 = vpack.c.b16 %v49, %v49
    %v52 = vpack.c.b16 %v50, %v50
    %v78 = vunpack.c.l.b16 %v17
    %v79 = vunpack.c.l.b16 %v18
    %v80 = vunpack.c.l.b16 %v19
    %v81 = vunpack.c.l.b16 %v20
    %v82 = vunpack.c.l.b16 %v21
    %v83 = vunpack.c.l.b16 %v22
    %v84 = vunpack.c.l.b16 %v23
    %v85 = vunpack.c.l.b16 %v24
    %v86 = vunpack.c.l.b16 %v25
    %v87 = vunpack.c.l.b16 %v26
    %v88 = vunpack.c.l.b16 %v27
    %v89 = vunpack.c.l.b16 %v28
    %v90 = vunpack.c.l.b16 %v29
    %v91 = vunpack.c.l.b16 %v30
    %v92 = vunpack.c.l.b16 %v31
    %v93 = vunpack.c.l.b16 %v32
    %v94 = vunpack.c.l.b16 %v33
    %v95 = vunpack.c.l.b16 %v34
    %v96 = vunpack.c.l.b16 %v35
    %v97 = vunpack.c.l.b16 %v36
    %v98 = vunpack.c.l.b16 %v37
    %v99 = vunpack.c.l.b16 %v38
    %v100 = vunpack.c.l.b16 %v39
    %v101 = vunpack.c.l.b16 %v40
    %v102 = vpack.c.b16 %v79, %v78
    %v103 = vpack.c.b16 %v81, %v80
    %v104 = vpack.c.b16 %v83, %v82
    %v105 = vpack.c.b16 %v85, %v84
    %v106 = vpack.c.b16 %v87, %v86
    %v107 = vpack.c.b16 %v89, %v88
    %v108 = vpack.c.b16 %v91, %v90
    %v109 = vpack.c.b16 %v93, %v92
    %v110 = vpack.c.b16 %v95, %v94
    %v111 = vpack.c.b16 %v97, %v96
    %v112 = vpack.c.b16 %v99, %v98
    %v113 = vpack.c.b16 %v101, %v100
    %vm126 = vcmask 523264
    %v128 = vsel %vm126, %v52, 0
    %130 = vmatprep.subr.bf16.mxu0 0
    %131 = vmatpush1.bf16.msra.mxu0 %v102
    %132 = vmatprep.subr.bf16.mxu0 0
    %133 = vmatpush1.bf16.msra.mxu0 %v103
    %134 = vmatprep.subr.bf16.mxu0 0
    %135 = vmatpush1.bf16.msra.mxu0 %v104
    %136 = vmatprep.subr.bf16.mxu0 0
    %137 = vmatpush1.bf16.msra.mxu0 %v105
    %138 = vmatprep.subr.bf16.mxu0 0
    %139 = vmatpush1.bf16.msra.mxu0 %v106
    %140 = vmatprep.subr.bf16.mxu0 0
    %141 = vmatpush1.bf16.msra.mxu0 %v107
    %142 = vmatprep.subr.bf16.mxu0 0
    %143 = vmatpush1.bf16.msra.mxu0 %v108
    %144 = vmatprep.subr.bf16.mxu0 0
    %145 = vmatpush1.bf16.msra.mxu0 %v109
    %146 = vmatprep.subr.bf16.mxu0 0
    %147 = vmatpush1.bf16.msra.mxu0 %v110
    %148 = vmatprep.subr.bf16.mxu0 0
    %149 = vmatpush1.bf16.msra.mxu0 %v111
    %150 = vmatprep.subr.bf16.mxu0 0
    %151 = vmatpush1.bf16.msra.mxu0 %v112
    %152 = vmatprep.subr.bf16.mxu0 0
    %153 = vmatpush1.bf16.msra.mxu0 %v113
    %154 = vmatprep.subr.bf16.mxu0 0
    %155 = vmatpush1.bf16.msra.mxu0 0
    %156 = vmatprep.subr.bf16.mxu0 0
    %157 = vmatpush1.bf16.msra.mxu0 0
    %158 = vmatprep.subr.bf16.mxu0 0
    %159 = vmatpush1.bf16.msra.mxu0 0
    %160 = vmatprep.subr.bf16.mxu0 0
    %161 = vmatpush1.bf16.msra.mxu0 0
    %162 = vmatprep.mubr.bf16.mxu0 %v128
    %163 = vmatmul.mubr.bf16.gmra.mrb[0].mxu0 %v51
    %v164 = vpop.f32.mrb[0].mxu0
    %v165 = vadd.f32 %v46, %v164
    %v166 = vpop.f32.mrb[0].mxu0
    %v167 = vpop.f32.mrb[0].mxu0
    %v168 = vpop.f32.mrb[0].mxu0
    %169 = vdwg.mxu0
    %vm170 = vcmask 261120
    %171 = vst.msk [vmem:[#allocation2] sm:$0xff] %vm170, %v165
    // Predicated region
    $region14: #{tpu_custom_call.1} parent=1 // pred_check
      _
    $region15: #{tpu_custom_call.1} parent=1 // pred_check_branch
      %173 = sbr.rel (0) target = $region17
    $region16: #{tpu_custom_call.1} parent=1 // pred_region
      %s175 = ssub.s32 128, 128
      %176 = vsyncadd [#allocation3], %s175
      %s178 = sshll.u32 [#allocation2], 4
      %s179 = int_to_ptr.vmem [resolvable:$true] %s178
      %181 = dma.vmem_to_hbm [thread:$0]  %s179, 128, %s3, [#allocation3]
    $region17: #{tpu_custom_call.1} parent=1 // pred_fallthru
      _
    // Predicated region
    $region18: #{tpu_custom_call.1} parent=1 // pred_check
      _
    $region19: #{tpu_custom_call.1} parent=1 // pred_check_branch
      %183 = sbr.rel (0) target = $region21
    $region20: #{tpu_custom_call.1} parent=1 // pred_region
      %184 = dma.done [#allocation3], 128
    $region21: #{tpu_custom_call.1} parent=1 // pred_fallthru
      _
    %185 = vsyncpa [#allocation3], 1

</llo_original>
